<compile_context>
chip_gen: v5e
topology: v5e:2x2
jax: 0.10.0
libtpu: 0.0.40
codegen_flags: <defaults>
</compile_context>

<pallas_src>
import functools

import jax
import jax.numpy as jnp
from jax import lax
from jax.experimental import pallas as pl
from jax.experimental.pallas import tpu as pltpu

SMOOTH = 1.0

# Per-input HBM->VMEM block budget (bytes).  2 inputs x 2 pipeline buffers x
# 3 MiB ~= 12 MiB resident + tiny accumulators, within the 32 MiB scoped VMEM
# limit below on every generation (v5e/v6e: 128 MiB physical, v7x: 64 MiB/TC).
_MAX_BLOCK_BYTES = 3 * 1024 * 1024
_VMEM_LIMIT_BYTES = 32 * 1024 * 1024


def _choose_tr(rows, lanes, max_elems):
    """Rows per block: whole plane if it fits, else a large multiple of 8."""
    tr = max_elems // max(lanes, 1)
    if tr >= rows:
        return rows                   # whole plane in one block
    return max(8, (tr // 8) * 8)      # sublane rule: multiple of 8


def _dice_sums_kernel(p_ref, t_ref, out_ref, acc_pt, acc_ps, *,
                      rows, tr, n_r_total, n_r_split, acc_rows, has_tail):
    s = pl.program_id(0)              # core-split over row-block ranges (v7x)
    h = pl.program_id(2)              # reduction axis within one split

    @pl.when(h == 0)
    def _init():
        acc_pt[...] = jnp.zeros_like(acc_pt)
        acc_ps[...] = jnp.zeros_like(acc_ps)

    p = p_ref[...].astype(jnp.float32)
    t = t_ref[...].astype(jnp.float32)

    def _fold(x):
        # (tr, lanes) -> (acc_rows, lanes) via pure VPU adds; the reshape
        # splits the sublane axis on a tile boundary, so it is a free view.
        if tr == acc_rows:
            return x
        return jnp.sum(x.reshape(tr // acc_rows, acc_rows, x.shape[-1]),
                       axis=0)

    def _accumulate(pp, tt):
        acc_pt[...] += _fold(pp * tt)
        acc_ps[...] += _fold(pp + tt)

    if has_tail:
        g = s * n_r_split + h                   # global row-block index
        is_tail = g == (n_r_total - 1)

        @pl.when(jnp.logical_not(is_tail))
        def _full_block():
            _accumulate(p, t)

        @pl.when(is_tail)                        # masking only on tail block
        def _tail_block():
            ridx = lax.broadcasted_iota(jnp.int32, p.shape, 0)
            valid = (g * tr + ridx) < rows
            _accumulate(jnp.where(valid, p, 0.0), jnp.where(valid, t, 0.0))
    else:
        _accumulate(p, t)

    @pl.when(h == pl.num_programs(2) - 1)
    def _finalize():
        s_pt = jnp.sum(acc_pt[...])   # one-time XLU reduce per (split, sample)
        s_ps = jnp.sum(acc_ps[...])
        # Lane-dense (8,128) stores of the broadcast scalars.
        out_ref[0] = jnp.full((8, 128), s_pt, jnp.float32)
        out_ref[1] = jnp.full((8, 128), s_ps, jnp.float32)


def _dice_sums(y_pred, y_true):
    """Per-(split, sample) [sum(p*t), sum(p)+sum(t)] over channel 0 (NCHW)."""
    N, C, H, W = y_pred.shape
    HW = H * W

    # Lane-dense presentation of the contiguous channel-0 plane (free reshape
    # of trailing dims, no HBM copy) whenever H*W is a multiple of 128.
    if HW % 128 == 0:
        rows, lanes = HW // 128, 128
        y_pred = y_pred.reshape(N, C, rows, lanes)
        y_true = y_true.reshape(N, C, rows, lanes)
    else:
        rows, lanes = H, W            # fallback: W on the lane axis

    itemsize = max(jnp.dtype(y_pred.dtype).itemsize,
                   jnp.dtype(y_true.dtype).itemsize)
    tr = _choose_tr(rows, lanes, _MAX_BLOCK_BYTES // itemsize)
    n_r = pl.cdiv(rows, tr)

    # v7x megacore helper: when there is more than one row block (and the
    # count is even, so no out-of-range block indices), split the reduction
    # range across a leading parallel axis.  No effect on 1-TC chips.
    nsplit = 2 if (n_r >= 2 and n_r % 2 == 0) else 1
    n_r_split = n_r // nsplit

    acc_rows = 8 if tr % 8 == 0 else tr         # tiny resident accumulators
    has_tail = (rows % tr) != 0

    kern = functools.partial(
        _dice_sums_kernel, rows=rows, tr=tr, n_r_total=n_r,
        n_r_split=n_r_split, acc_rows=acc_rows, has_tail=has_tail)

    # Channel selection lives entirely in the index_map: only c == 0 blocks
    # are ever DMA'd from HBM.
    in_spec = pl.BlockSpec((None, None, tr, lanes),
                           lambda s, n, h: (n, 0, s * n_r_split + h, 0))
    # One disjoint output block per (split, sample) -> safe under the two
    # leading "parallel" axes.
    out_spec = pl.BlockSpec((None, None, 2, 8, 128),
                            lambda s, n, h: (s, n, 0, 0, 0))

    in_bytes = N * HW * (jnp.dtype(y_pred.dtype).itemsize
                         + jnp.dtype(y_true.dtype).itemsize)
    out_bytes = nsplit * N * 2 * 8 * 128 * 4
    cost = pl.CostEstimate(flops=3 * N * HW, transcendentals=0,
                           bytes_accessed=in_bytes + out_bytes)

    return pl.pallas_call(
        kern,
        out_shape=jax.ShapeDtypeStruct((nsplit, N, 2, 8, 128), jnp.float32),
        grid_spec=pltpu.PrefetchScalarGridSpec(
            num_scalar_prefetch=0,
            grid=(nsplit, N, n_r_split),
            in_specs=[in_spec, in_spec],
            out_specs=out_spec,
            scratch_shapes=[
                pltpu.VMEM((acc_rows, lanes), jnp.float32),  # sum(p*t) partials
                pltpu.VMEM((acc_rows, lanes), jnp.float32),  # sum(p+t) partials
            ],
        ),
        compiler_params=pltpu.CompilerParams(
            dimension_semantics=("parallel", "parallel", "arbitrary"),
            vmem_limit_bytes=_VMEM_LIMIT_BYTES,
        ),
        cost_estimate=cost,
    )(y_pred, y_true)


@jax.jit
def dice_loss(y_pred, y_true):
    """Matches DiceLoss.forward: operates on channel 0 only."""
    assert y_pred.shape == y_true.shape
    sums = _dice_sums(y_pred, y_true)             # (nsplit, N, 2, 8, 128)
    intersection = jnp.sum(sums[:, :, 0, 0, 0])   # sum over splits + samples
    p_plus_t = jnp.sum(sums[:, :, 1, 0, 0])
    dsc = (2.0 * intersection + SMOOTH) / (p_plus_t + SMOOTH)
    return 1.0 - dsc


def _reference_dice_loss(y_pred, y_true):
    p = y_pred[:, 0].reshape(-1).astype(jnp.float32)
    t = y_true[:, 0].reshape(-1).astype(jnp.float32)
    inter = jnp.sum(p * t)
    dsc = (2.0 * inter + SMOOTH) / (jnp.sum(p) + jnp.sum(t) + SMOOTH)
    return 1.0 - dsc


if __name__ == "__main__":
    key = jax.random.PRNGKey(0)
    k1, k2 = jax.random.split(key)
    # Small shapes consistent with the module: NCHW
    N, C, H, W = 2, 4, 16, 16
    y_pred = jax.nn.sigmoid(jax.random.normal(k1, (N, C, H, W), jnp.float32))
    y_true = (jax.random.uniform(k2, (N, C, H, W)) > 0.5).astype(jnp.float32)

    loss = jax.block_until_ready(dice_loss(y_pred, y_true))
    ref = jax.block_until_ready(_reference_dice_loss(y_pred, y_true))
    assert jnp.allclose(loss, ref, atol=1e-5, rtol=1e-5), (loss, ref)
    print("KERNEL_OK")
</pallas_src>

<mosaic_0001>
module attributes {stable_mosaic.version = 11 : i64} {
  func.func @_dice_sums_kernel(%arg0: i32, %arg1: i32, %arg2: i32, %arg3: memref<1x1x2x128xf32, #tpu.memory_space<vmem>>, %arg4: memref<1x1x2x128xf32, #tpu.memory_space<vmem>>, %arg5: memref<1x1x2x8x128xf32, #tpu.memory_space<vmem>>, %arg6: memref<2x128xf32, #tpu.memory_space<vmem>>, %arg7: memref<2x128xf32, #tpu.memory_space<vmem>>) attributes {dimension_semantics = [#tpu.dimension_semantics<parallel>, #tpu.dimension_semantics<parallel>, #tpu.dimension_semantics<arbitrary>], iteration_bounds = array<i64: 1, 2, 1>, scalar_prefetch = 0 : i64, scratch_operands = 2 : i64, tpu.core_type = #tpu.core_type<tc>, window_params = [{transform_indices = @transform_0, window_bounds = array<i64: 1, 1, 2, 128>}, {transform_indices = @transform_1, window_bounds = array<i64: 1, 1, 2, 128>}, {transform_indices = @transform_2, window_bounds = array<i64: 1, 1, 2, 8, 128>}]} {
    %c0_i32 = arith.constant 0 : i32
    %0 = arith.cmpi eq, %arg2, %c0_i32 : i32
    %1 = arith.extui %0 : i1 to i32
    %c0_i32_0 = arith.constant 0 : i32
    %2 = arith.cmpi ne, %1, %c0_i32_0 : i32
    scf.if %2 {
      %cst = arith.constant 0.000000e+00 : f32
      %18 = vector.broadcast %cst : f32 to vector<2x128xf32>
      %c0_18 = arith.constant 0 : index
      %c0_19 = arith.constant 0 : index
      %19 = vector.load %arg6[%c0_18, %c0_19] : memref<2x128xf32, #tpu.memory_space<vmem>>, vector<2x128xf32>
      tpu.vector_store %arg6[%c0_18, %c0_19], %18 {strides = array<i32>} : memref<2x128xf32, #tpu.memory_space<vmem>>, vector<2x128xf32>,
      %cst_20 = arith.constant 0.000000e+00 : f32
      %20 = vector.broadcast %cst_20 : f32 to vector<2x128xf32>
      %c0_21 = arith.constant 0 : index
      %c0_22 = arith.constant 0 : index
      %21 = vector.load %arg7[%c0_21, %c0_22] : memref<2x128xf32, #tpu.memory_space<vmem>>, vector<2x128xf32>
      tpu.vector_store %arg7[%c0_21, %c0_22], %20 {strides = array<i32>} : memref<2x128xf32, #tpu.memory_space<vmem>>, vector<2x128xf32>,
    } else {
    }
    %c0 = arith.constant 0 : index
    %c0_1 = arith.constant 0 : index
    %c0_2 = arith.constant 0 : index
    %c0_3 = arith.constant 0 : index
    %3 = vector.load %arg3[%c0, %c0_1, %c0_2, %c0_3] : memref<1x1x2x128xf32, #tpu.memory_space<vmem>>, vector<1x1x2x128xf32>
    %4 = vector.shape_cast %3 : vector<1x1x2x128xf32> to vector<2x128xf32>
    %c0_4 = arith.constant 0 : index
    %c0_5 = arith.constant 0 : index
    %c0_6 = arith.constant 0 : index
    %c0_7 = arith.constant 0 : index
    %5 = vector.load %arg4[%c0_4, %c0_5, %c0_6, %c0_7] : memref<1x1x2x128xf32, #tpu.memory_space<vmem>>, vector<1x1x2x128xf32>
    %6 = vector.shape_cast %5 : vector<1x1x2x128xf32> to vector<2x128xf32>
    %c0_8 = arith.constant 0 : index
    %c0_9 = arith.constant 0 : index
    %7 = vector.load %arg6[%c0_8, %c0_9] : memref<2x128xf32, #tpu.memory_space<vmem>>, vector<2x128xf32>
    %8 = arith.mulf %4, %6 : vector<2x128xf32>
    %9 = arith.addf %7, %8 : vector<2x128xf32>
    %c0_10 = arith.constant 0 : index
    %c0_11 = arith.constant 0 : index
    %10 = vector.load %arg6[%c0_10, %c0_11] : memref<2x128xf32, #tpu.memory_space<vmem>>, vector<2x128xf32>
    tpu.vector_store %arg6[%c0_10, %c0_11], %9 {strides = array<i32>} : memref<2x128xf32, #tpu.memory_space<vmem>>, vector<2x128xf32>,
    %c0_12 = arith.constant 0 : index
    %c0_13 = arith.constant 0 : index
    %11 = vector.load %arg7[%c0_12, %c0_13] : memref<2x128xf32, #tpu.memory_space<vmem>>, vector<2x128xf32>
    %12 = arith.addf %4, %6 : vector<2x128xf32>
    %13 = arith.addf %11, %12 : vector<2x128xf32>
    %c0_14 = arith.constant 0 : index
    %c0_15 = arith.constant 0 : index
    %14 = vector.load %arg7[%c0_14, %c0_15] : memref<2x128xf32, #tpu.memory_space<vmem>>, vector<2x128xf32>
    tpu.vector_store %arg7[%c0_14, %c0_15], %13 {strides = array<i32>} : memref<2x128xf32, #tpu.memory_space<vmem>>, vector<2x128xf32>,
    %c0_i32_16 = arith.constant 0 : i32
    %15 = arith.cmpi eq, %arg2, %c0_i32_16 : i32
    %16 = arith.extui %15 : i1 to i32
    %c0_i32_17 = arith.constant 0 : i32
    %17 = arith.cmpi ne, %16, %c0_i32_17 : i32
    scf.if %17 {
      %c0_18 = arith.constant 0 : index
      %c0_19 = arith.constant 0 : index
      %18 = vector.load %arg6[%c0_18, %c0_19] : memref<2x128xf32, #tpu.memory_space<vmem>>, vector<2x128xf32>
      %19 = vector.shape_cast %18 : vector<2x128xf32> to vector<1x2x128xf32>
      %cst = arith.constant dense<0.000000e+00> : vector<1xf32>
      %20 = vector.multi_reduction <add>, %19, %cst [1, 2] : vector<1x2x128xf32> to vector<1xf32>
      %21 = vector.shape_cast %20 : vector<1xf32> to vector<1x1x1xf32>
      %22 = vector.extract %21[0, 0, 0] : f32 from vector<1x1x1xf32>
      %c0_20 = arith.constant 0 : index
      %c0_21 = arith.constant 0 : index
      %23 = vector.load %arg7[%c0_20, %c0_21] : memref<2x128xf32, #tpu.memory_space<vmem>>, vector<2x128xf32>
      %24 = vector.shape_cast %23 : vector<2x128xf32> to vector<1x2x128xf32>
      %cst_22 = arith.constant dense<0.000000e+00> : vector<1xf32>
      %25 = vector.multi_reduction <add>, %24, %cst_22 [1, 2] : vector<1x2x128xf32> to vector<1xf32>
      %26 = vector.shape_cast %25 : vector<1xf32> to vector<1x1x1xf32>
      %27 = vector.extract %26[0, 0, 0] : f32 from vector<1x1x1xf32>
      %28 = vector.broadcast %22 : f32 to vector<8x128xf32>
      %c0_23 = arith.constant 0 : index
      %c0_24 = arith.constant 0 : index
      %c0_25 = arith.constant 0 : index
      %c0_26 = arith.constant 0 : index
      %c0_27 = arith.constant 0 : index
      %29 = vector.load %arg5[%c0_23, %c0_24, %c0_25, %c0_26, %c0_27] : memref<1x1x2x8x128xf32, #tpu.memory_space<vmem>>, vector<1x1x1x8x128xf32>
      %30 = vector.shape_cast %29 : vector<1x1x1x8x128xf32> to vector<8x128xf32>
      %31 = vector.shape_cast %28 : vector<8x128xf32> to vector<1x1x1x8x128xf32>
      tpu.vector_store %arg5[%c0_23, %c0_24, %c0_25, %c0_26, %c0_27], %31 {strides = array<i32>} : memref<1x1x2x8x128xf32, #tpu.memory_space<vmem>>, vector<1x1x1x8x128xf32>,
      %32 = vector.broadcast %27 : f32 to vector<8x128xf32>
      %c0_28 = arith.constant 0 : index
      %c0_29 = arith.constant 0 : index
      %c1 = arith.constant 1 : index
      %c0_30 = arith.constant 0 : index
      %c0_31 = arith.constant 0 : index
      %33 = vector.load %arg5[%c0_28, %c0_29, %c1, %c0_30, %c0_31] : memref<1x1x2x8x128xf32, #tpu.memory_space<vmem>>, vector<1x1x1x8x128xf32>
      %34 = vector.shape_cast %33 : vector<1x1x1x8x128xf32> to vector<8x128xf32>
      %35 = vector.shape_cast %32 : vector<8x128xf32> to vector<1x1x1x8x128xf32>
      tpu.vector_store %arg5[%c0_28, %c0_29, %c1, %c0_30, %c0_31], %35 {strides = array<i32>} : memref<1x1x2x8x128xf32, #tpu.memory_space<vmem>>, vector<1x1x1x8x128xf32>,
    } else {
    }
    return
  }
  func.func @transform_0(%arg0: i32, %arg1: i32, %arg2: i32) -> (i32, i32, i32, i32) {
    %c1_i32 = arith.constant 1 : i32
    %0 = arith.muli %arg0, %c1_i32 : i32
    %1 = arith.addi %0, %arg2 : i32
    %c0_i32 = arith.constant 0 : i32
    %c0_i32_0 = arith.constant 0 : i32
    %c0_i32_1 = arith.constant 0 : i32
    return %arg1, %c0_i32, %1, %c0_i32_0 : i32, i32, i32, i32
  }
  func.func @transform_1(%arg0: i32, %arg1: i32, %arg2: i32) -> (i32, i32, i32, i32) {
    %c1_i32 = arith.constant 1 : i32
    %0 = arith.muli %arg0, %c1_i32 : i32
    %1 = arith.addi %0, %arg2 : i32
    %c0_i32 = arith.constant 0 : i32
    %c0_i32_0 = arith.constant 0 : i32
    %c0_i32_1 = arith.constant 0 : i32
    return %arg1, %c0_i32, %1, %c0_i32_0 : i32, i32, i32, i32
  }
  func.func @transform_2(%arg0: i32, %arg1: i32, %arg2: i32) -> (i32, i32, i32, i32, i32) {
    %c0_i32 = arith.constant 0 : i32
    %c0_i32_0 = arith.constant 0 : i32
    %c0_i32_1 = arith.constant 0 : i32
    %c0_i32_2 = arith.constant 0 : i32
    return %arg0, %arg1, %c0_i32, %c0_i32_0, %c0_i32_1 : i32, i32, i32, i32, i32
  }
}

</mosaic_0001>

<llo_original>
// kernel: dice_loss.1
$region0: #{dice_loss.1}
  #allocation0 [shape = 'u32[]', space=smem, size = 0x4, offset = 0x4, fixed_abs, tag = 'smem constant byte address 0x4 - core index']
  #allocation1 [shape = 'u32[72,128]{1,0:T(1,128)}', space=vmem, size = 0x9000, scoped, tag = 'internal scratch']
  #allocation2 [shape = 'f32[2,128]{1,0:T(2,128)}', space=vmem, size = 0x400, scoped, tag = 'scratch operand']
  #allocation3 [shape = 'f32[2,128]{1,0:T(2,128)}', space=vmem, size = 0x400, scoped, tag = 'scratch operand']
  %s0 = inlined_call_operand.vmem [shape: f32[2,4,2,128], index: 0, kind: input, shape index: {}]
  %s1 = inlined_call_operand.vmem [shape: f32[2,4,2,128], index: 1, kind: input, shape index: {}]
  %s2 = inlined_call_operand.vmem [shape: f32[1,2,2,8,128], index: 2, kind: output, shape index: {}]
  %s3 = sld [smem:[#allocation0]]
  $region49: #{dice_loss.1} parent=0
    _
  %s5 = ssub.s32 1, %s3
  %s6 = scalar_select 0, %s5, %s3
  loop: start=0, step=1, limit=4
  $region2: #{dice_loss.1} parent=0 // loop_pre_header
    _
  $region3: #{dice_loss.1} parent=0 // loop_header
    %s8 = sphi 0, %s12
    %p9 = scmp.ge.s32.totalorder %s8, 4
    %s15 = sphi 0, %s34
    %s16 = sphi 0, %s30
    %s17 = sphi 0, %s26
    %s18 = sphi 0, %s15
    %s19 = sphi 0, %s16
    %s20 = sphi 0, %s17
    %s21 = sphi 0, %s18
    %s22 = sphi 0, %s19
    %s23 = sphi 0, %s20
    %s41 = sphi 0, %s43
    %s44 = sphi 0, %s41
    %s45 = sphi 0, %s44
    %s61 = sphi 0, %s45
    %s71 = sphi 0, %s73
    %s74 = sphi 0, %s71
    %s75 = sphi 0, %s74
    %s91 = sphi 0, %s75
    %s99 = sphi 0, %s101
    %s102 = sphi 0, %s99
    %s103 = sphi 0, %s102
    %s119 = sphi 0, %s103
  $region4: #{dice_loss.1} parent=0 // loop_header_branch
    %11 = sbr.rel (%p9) target = $region8
  $region5: #{dice_loss.1} parent=0 // loop_body
    %s13 = ssub.s32 %s8, 1
    %s14 = ssub.s32 %s8, 2
    %s24 = sadd.s32 1, %s17
    %p25 = scmp.ge.s32.totalorder %s24, 1
    %s26 = scalar_select %p25, 0, %s24
    %s27 = sadd.s32 1, %s16
    %s28 = scalar_select %p25, %s27, %s16
    %p29 = scmp.ge.s32.totalorder %s28, 2
    %s30 = scalar_select %p29, 0, %s28
    %s31 = sadd.s32 1, %s15
    %s32 = scalar_select %p29, %s31, %s15
    %p33 = scmp.ge.s32.totalorder %s32, 1
    %s34 = scalar_select %p33, 0, %s32
    %s35 = sadd.s32 %s15, %s17
    %s36 = sadd.s32 %s34, %s26
    %s37 = ssub.s32 %s16, %s30
    %s38 = ssub.s32 %s35, %s36
    %s39 = sor.u32 %s37, %s38
    %p40 = scmp.eq.s32.totalorder %s39, 0
    %s42 = sadd.s32 %s41, 1
    %s43 = scalar_select %p40, %s41, %s42
    %p46 = pneg %p40
    %p47 = scmp.eq.s32.totalorder %s8, 1
    %p48 = por %p46, %p47
    %p49 = scmp.ne.s32.totalorder %s41, %s44
    %p50 = scmp.eq.s32.totalorder %s8, 0
    %p51 = por %p49, %p50
    %p52 = scmp.ne.s32.totalorder %s41, %s44
    %p53 = scmp.eq.s32.totalorder %s13, 1
    %p54 = por %p52, %p53
    %p55 = scmp.ne.s32.totalorder %s44, %s45
    %p56 = scmp.eq.s32.totalorder %s13, 0
    %p57 = por %p55, %p56
    %p58 = scmp.ne.s32.totalorder %s44, %s45
    %p59 = scmp.eq.s32.totalorder %s14, 1
    %p60 = por %p58, %p59
    %p62 = scmp.ne.s32.totalorder %s45, %s61
    %p63 = scmp.eq.s32.totalorder %s14, 0
    %p64 = por %p62, %p63
    %s65 = sadd.s32 %s15, %s17
    %s66 = sadd.s32 %s34, %s26
    %s67 = ssub.s32 %s16, %s30
    %s68 = ssub.s32 %s65, %s66
    %s69 = sor.u32 %s67, %s68
    %p70 = scmp.eq.s32.totalorder %s69, 0
    %s72 = sadd.s32 %s71, 1
    %s73 = scalar_select %p70, %s71, %s72
    %p76 = pneg %p70
    %p77 = scmp.eq.s32.totalorder %s8, 1
    %p78 = por %p76, %p77
    %p79 = scmp.ne.s32.totalorder %s71, %s74
    %p80 = scmp.eq.s32.totalorder %s8, 0
    %p81 = por %p79, %p80
    %p82 = scmp.ne.s32.totalorder %s71, %s74
    %p83 = scmp.eq.s32.totalorder %s13, 1
    %p84 = por %p82, %p83
    %p85 = scmp.ne.s32.totalorder %s74, %s75
    %p86 = scmp.eq.s32.totalorder %s13, 0
    %p87 = por %p85, %p86
    %p88 = scmp.ne.s32.totalorder %s74, %s75
    %p89 = scmp.eq.s32.totalorder %s14, 1
    %p90 = por %p88, %p89
    %p92 = scmp.ne.s32.totalorder %s75, %s91
    %p93 = scmp.eq.s32.totalorder %s14, 0
    %p94 = por %p92, %p93
    %s95 = ssub.s32 %s15, %s34
    %s96 = ssub.s32 %s16, %s30
    %s97 = sor.u32 %s95, %s96
    %p98 = scmp.eq.s32.totalorder %s97, 0
    %s100 = sadd.s32 %s99, 1
    %s101 = scalar_select %p98, %s99, %s100
    %p104 = pneg %p98
    %p105 = scmp.eq.s32.totalorder %s8, 1
    %p106 = por %p104, %p105
    %p107 = scmp.ne.s32.totalorder %s99, %s102
    %p108 = scmp.eq.s32.totalorder %s8, 0
    %p109 = por %p107, %p108
    %p110 = scmp.ne.s32.totalorder %s99, %s102
    %p111 = scmp.eq.s32.totalorder %s13, 1
    %p112 = por %p110, %p111
    %p113 = scmp.ne.s32.totalorder %s102, %s103
    %p114 = scmp.eq.s32.totalorder %s13, 0
    %p115 = por %p113, %p114
    %p116 = scmp.ne.s32.totalorder %s102, %s103
    %p117 = scmp.eq.s32.totalorder %s14, 1
    %p118 = por %p116, %p117
    %p120 = scmp.ne.s32.totalorder %s103, %s119
    %p121 = scmp.eq.s32.totalorder %s14, 0
    %p122 = por %p120, %p121
    %p123 = scmp.le.s32.totalorder 1, %s8
    %p124 = scmp.lt.s32.totalorder %s8, 3
    %p125 = pnand %p123, %p124
    %p126 = pneg %p125
    // Predicated region
    $region9: #{dice_loss.1} parent=5 // pred_check
      _
    $region10: #{dice_loss.1} parent=5 // pred_check_branch
      %128 = sbr.rel (%p125) target = $region12
    $region11: #{dice_loss.1} parent=5 // pred_region
      %s129 = ssub.s32 %s8, 1
    $region12: #{dice_loss.1} parent=5 // pred_fallthru
      _
    %p130 = scmp.lt.s32.totalorder %s8, 2
    // Predicated region
    $region13: #{dice_loss.1} parent=5 // pred_check
      %p131 = pneg %p130
    $region14: #{dice_loss.1} parent=5 // pred_check_branch
      %133 = sbr.rel (%p131) target = $region16
    $region15: #{dice_loss.1} parent=5 // pred_region
      // Predicated region
      $region17: #{dice_loss.1} parent=15 // pred_check
        %p134 = pneg %p51
      $region18: #{dice_loss.1} parent=15 // pred_check_branch
        %136 = sbr.rel (%p134) target = $region20
      $region19: #{dice_loss.1} parent=15 // pred_region
        %s137 = sadd.s32 %s15, %s17
        %p138 = scmp.lt.s32.totalorder %s16, 1
        %s139 = scalar_select %p138, %s16, 1
        %p140 = scmp.lt.s32.totalorder %s137, 0
        %s141 = scalar_select %p140, %s137, 0
        %s142 = smul.addr %s139, 4
        %s143 = sadd.s32 %s141, %s142
        %s144 = smul.addr %s143, 2
        %s145 = scalar_lea.vmem %s0, %s144
        %s146 = sadd.s32 %s15, %s17
      $region20: #{dice_loss.1} parent=15 // pred_fallthru
        _
      // Predicated region
      $region21: #{dice_loss.1} parent=15 // pred_check
        %p147 = pneg %p81
      $region22: #{dice_loss.1} parent=15 // pred_check_branch
        %149 = sbr.rel (%p147) target = $region24
      $region23: #{dice_loss.1} parent=15 // pred_region
        %s150 = sadd.s32 %s15, %s17
        %p151 = scmp.lt.s32.totalorder %s16, 1
        %s152 = scalar_select %p151, %s16, 1
        %p153 = scmp.lt.s32.totalorder %s150, 0
        %s154 = scalar_select %p153, %s150, 0
        %s155 = smul.addr %s152, 4
        %s156 = sadd.s32 %s154, %s155
        %s157 = smul.addr %s156, 2
        %s158 = scalar_lea.vmem %s1, %s157
        %s159 = sadd.s32 %s15, %s17
      $region24: #{dice_loss.1} parent=15 // pred_fallthru
        _
    $region16: #{dice_loss.1} parent=5 // pred_fallthru
      _
    %p160 = scmp.le.s32.totalorder 1, %s8
    %p161 = scmp.lt.s32.totalorder %s8, 3
    %p162 = pnand %p160, %p161
    %p163 = pneg %p162
    // Predicated region
    $region25: #{dice_loss.1} parent=5 // pred_check
      _
    $region26: #{dice_loss.1} parent=5 // pred_check_branch
      %165 = sbr.rel (%p162) target = $region28
    $region27: #{dice_loss.1} parent=5 // pred_region
      %s166 = ssub.s32 %s8, 1
      %s167 = sadd.s32 %s18, %s20
      %p168 = scmp.lt.s32.totalorder %s19, 1
      %s169 = scalar_select %p168, %s19, 1
      %p170 = scmp.lt.s32.totalorder %s167, 0
      %s171 = scalar_select %p170, %s167, 0
      %s172 = smul.addr %s169, 4
      %s173 = sadd.s32 %s171, %s172
      %s174 = smul.addr %s173, 2
      %s175 = scalar_lea.vmem %s0, %s174
      %p176 = pneg %p57
      %p177 = pneg %p54
      %s178 = sadd.s32 %s18, %s20
      %p179 = scmp.lt.s32.totalorder %s19, 1
      %s180 = scalar_select %p179, %s19, 1
      %p181 = scmp.lt.s32.totalorder %s178, 0
      %s182 = scalar_select %p181, %s178, 0
      %s183 = smul.addr %s180, 4
      %s184 = sadd.s32 %s182, %s183
      %s185 = smul.addr %s184, 2
      %s186 = scalar_lea.vmem %s1, %s185
      %p187 = pneg %p87
      %p188 = pneg %p84
      %p189 = pneg %p115
      %p190 = pneg %p112
      %p191 = scmp.lt.s32.totalorder %s18, 0
      %s192 = scalar_select %p191, %s18, 0
      %p193 = scmp.lt.s32.totalorder %s19, 1
      %s194 = scalar_select %p193, %s19, 1
      %s195 = smul.addr %s194, 2
      %s196 = smul.addr %s192, 4
      %s197 = sadd.s32 %s195, %s196
      %s198 = smul.addr %s197, 8
      %s199 = scalar_lea.vmem %s2, %s198
      %s200 = sadd.s32 %s18, %s20
      %p201 = scmp.lt.s32.totalorder %s19, 1
      %s202 = scalar_select %p201, %s19, 1
      %p203 = scmp.lt.s32.totalorder %s200, 0
      %s204 = scalar_select %p203, %s200, 0
      %s205 = smul.addr %s202, 4
      %s206 = sadd.s32 %s204, %s205
      %s207 = smul.addr %s206, 2
      %s208 = scalar_lea.vmem %s0, %s207
      %s209 = sadd.s32 %s18, %s20
      %s210 = sadd.s32 %s18, %s20
      %p211 = scmp.lt.s32.totalorder %s19, 1
      %s212 = scalar_select %p211, %s19, 1
      %p213 = scmp.lt.s32.totalorder %s210, 0
      %s214 = scalar_select %p213, %s210, 0
      %s215 = smul.addr %s212, 4
      %s216 = sadd.s32 %s214, %s215
      %s217 = smul.addr %s216, 2
      %s218 = scalar_lea.vmem %s1, %s217
      %s219 = sadd.s32 %s18, %s20
      %p220 = scmp.lt.s32.totalorder %s18, 0
      %s221 = scalar_select %p220, %s18, 0
      %p222 = scmp.lt.s32.totalorder %s19, 1
      %s223 = scalar_select %p222, %s19, 1
      %s224 = smul.addr %s223, 2
      %s225 = smul.addr %s221, 4
      %s226 = sadd.s32 %s224, %s225
      %s227 = smul.addr %s226, 8
      %s228 = scalar_lea.vmem %s2, %s227
      %p229 = scmp.eq.s32.totalorder %s20, 0
      // Predicated region
      $region29: #{dice_loss.1} parent=27 // pred_check
        %p230 = pneg %p229
      $region30: #{dice_loss.1} parent=27 // pred_check_branch
        %232 = sbr.rel (%p230) target = $region32
      $region31: #{dice_loss.1} parent=27 // pred_region
        %233 = vst [vmem:[#allocation2] sm:$0x3] 0.0
        %234 = vst [vmem:[#allocation3] sm:$0x3] 0.0
      $region32: #{dice_loss.1} parent=27 // pred_fallthru
        _
      %v235 = vld [vmem:[%s208] sm:$0x3]
      %v236 = vld [vmem:[%s218] sm:$0x3]
      %v237 = vld [vmem:[#allocation2] sm:$0x3]
      %v238 = vmul.f32 %v235, %v236
      %v239 = vadd.f32 %v237, %v238
      %240 = vst [vmem:[#allocation2] sm:$0x3] %v239
      %v241 = vld [vmem:[#allocation3] sm:$0x3]
      %v242 = vadd.f32 %v235, %v236
      %v243 = vadd.f32 %v241, %v242
      %244 = vst [vmem:[#allocation3] sm:$0x3] %v243
      // Predicated region
      $region33: #{dice_loss.1} parent=27 // pred_check
        %p245 = pneg %p229
      $region34: #{dice_loss.1} parent=27 // pred_check_branch
        %247 = sbr.rel (%p245) target = $region36
      $region35: #{dice_loss.1} parent=27 // pred_region
        %v248 = vld [vmem:[#allocation2] sm:$0x3]
        %vm249 = vcmask 1041408
        %v250 = vsel %vm249, %v248, 0.0
        %251 = vadd.xlane.f32.xlu0 %v250
        %v252 = vpop.xlane.xlu0 %251
        %v253 = vrot.slane %v252, 4
        %v254 = vadd.f32 %v252, %v253
        %v255 = vrot.slane %v254, 2
        %v256 = vadd.f32 %v254, %v255
        %v257 = vrot.slane %v256, 1
        %v258 = vadd.f32 %v256, %v257
        %s259 = vtos %v258
        %v260 = vld [vmem:[#allocation3] sm:$0x3]
        %v261 = vsel %vm249, %v260, 0.0
        %262 = vadd.xlane.f32.xlu0 %v261
        %v263 = vpop.xlane.xlu0 %262
        %v264 = vrot.slane %v263, 4
        %v265 = vadd.f32 %v263, %v264
        %v266 = vrot.slane %v265, 2
        %v267 = vadd.f32 %v265, %v266
        %v268 = vrot.slane %v267, 1
        %v269 = vadd.f32 %v267, %v268
        %s270 = vtos %v269
        %v271 = vstv %s259
        %272 = vst [vmem:[%s228] sm:$0xff] %v271
        %v273 = vstv %s270
        %s274 = scalar_lea.vmem %s228, 8
        %275 = vst [vmem:[%s274] sm:$0xff] %v273
      $region36: #{dice_loss.1} parent=27 // pred_fallthru
        _
      %p276 = scmp.lt.s32.totalorder %s18, 0
      %s277 = scalar_select %p276, %s18, 0
      %p278 = scmp.lt.s32.totalorder %s19, 1
      %s279 = scalar_select %p278, %s19, 1
      %s280 = smul.addr %s279, 2
      %s281 = smul.addr %s277, 4
      %s282 = sadd.s32 %s280, %s281
      %s283 = smul.addr %s282, 8
      %s284 = scalar_lea.vmem %s2, %s283
      // Predicated region
      $region37: #{dice_loss.1} parent=27 // pred_check
        %p285 = pneg %p112
      $region38: #{dice_loss.1} parent=27 // pred_check_branch
        %287 = sbr.rel (%p285) target = $region40
      $region39: #{dice_loss.1} parent=27 // pred_region
        _
      $region40: #{dice_loss.1} parent=27 // pred_fallthru
        _
    $region28: #{dice_loss.1} parent=5 // pred_fallthru
      _
    %p288 = scmp.le.s32.totalorder 2, %s8
    // Predicated region
    $region41: #{dice_loss.1} parent=5 // pred_check
      %p289 = pneg %p288
    $region42: #{dice_loss.1} parent=5 // pred_check_branch
      %291 = sbr.rel (%p289) target = $region44
    $region43: #{dice_loss.1} parent=5 // pred_region
      %s292 = ssub.s32 %s8, 2
      // Predicated region
      $region45: #{dice_loss.1} parent=43 // pred_check
        %p293 = pneg %p118
      $region46: #{dice_loss.1} parent=43 // pred_check_branch
        %295 = sbr.rel (%p293) target = $region48
      $region47: #{dice_loss.1} parent=43 // pred_region
        %p296 = scmp.lt.s32.totalorder %s21, 0
        %s297 = scalar_select %p296, %s21, 0
        %p298 = scmp.lt.s32.totalorder %s22, 1
        %s299 = scalar_select %p298, %s22, 1
        %s300 = smul.addr %s299, 2
        %s301 = smul.addr %s297, 4
        %s302 = sadd.s32 %s300, %s301
        %s303 = smul.addr %s302, 8
        %s304 = scalar_lea.vmem %s2, %s303
      $region48: #{dice_loss.1} parent=43 // pred_fallthru
        _
    $region44: #{dice_loss.1} parent=5 // pred_fallthru
      _
  $region6: #{dice_loss.1} parent=0 // loop_footer
    %s12 = sadd.s32 1, %s8
  $region7: #{dice_loss.1} parent=0 // loop_footer_branch
    %7 = sbr.rel target = $region3
  $region8: #{dice_loss.1} parent=0 // loop_exit
    _

</llo_original>
